<compile_context>
chip_gen: v6e
topology: v6e:2x2x1
jax: 0.10.0
libtpu: 0.0.40
codegen_flags: <defaults>
</compile_context>

<pallas_src>
import functools
import math

import jax
import jax.numpy as jnp
from jax.experimental import pallas as pl
from jax.experimental.pallas import tpu as pltpu


# ------------------------------- kernel -------------------------------------
def _fused_mlp_kernel(x_ref,    # VMEM [tT, D]  bf16 activations
                      w1_ref,   # VMEM [D, tK]  bf16 fused up-projection chunk
                      b1_ref,   # VMEM [1, tK]  f32 fused up-projection bias chunk
                      mix_ref,  # VMEM [1, tK]  f32 per-column expert mixing weight
                      w2_ref,   # VMEM [tK, D]  bf16 fused down-projection chunk
                      b2_ref,   # VMEM [1, D]   f32 mix-weighted summed output bias
                      o_ref,    # VMEM [tT, D]  output tile (input dtype)
                      acc_ref,  # VMEM [tT, D]  f32 accumulator, resident over K steps
                      *, gelu_approximate):
    k = pl.program_id(1)

    @pl.when(k == 0)
    def _():
        acc_ref[...] = jnp.zeros_like(acc_ref)

    # Up-projection chunk (bf16 x bf16 -> f32 on the MXU) + bias + GELU.
    h = jnp.dot(x_ref[...], w1_ref[...], preferred_element_type=jnp.float32)
    h = jax.nn.gelu(h + b1_ref[...], approximate=gelu_approximate)
    # Per-expert mixing weight applied as a per-column scale (VPU mul, hides
    # under the MXU).  Algebraically identical to scaling each expert output.
    h = h * mix_ref[...]

    # Down-projection chunk, accumulated in f32 across the fused-hidden axis.
    acc_ref[...] += jnp.dot(h.astype(w2_ref.dtype), w2_ref[...],
                            preferred_element_type=jnp.float32)

    @pl.when(k == pl.num_programs(1) - 1)
    def _():
        o_ref[...] = (acc_ref[...] + b2_ref[...]).astype(o_ref.dtype)


# --------------------------- tiling / VMEM helpers ---------------------------
def _round_up(n, m):
    return ((n + m - 1) // m) * m


def _pick_k_tile(K, target):
    """Largest aligned divisor of K that is <= target.

    Prefers 256 alignment (fills the 2x256^2 MXU N dim on v6e/v7x), falls back
    to 128 alignment, then to the full K (no partial reduction blocks ever)."""
    for align in (256, 128):
        t = min((target // align) * align, (K // align) * align)
        while t >= align:
            if K % t == 0:
                return t
            t -= align
    return K


def _vmem_capacity_bytes():
    try:
        return int(pltpu.get_tpu_info().vmem_capacity_bytes)
    except Exception:
        return 64 * 1024 * 1024          # v7x-safe fallback


def _footprint_bytes(tT, tK, D, act_bytes=2, w_bytes=2, out_bytes=4):
    """Approximate VMEM footprint of one pipelined step (double-buffered)."""
    xb = 2 * tT * D * act_bytes              # x tile
    w1b = 2 * D * tK * w_bytes                # W1 chunk
    w2b = 2 * tK * D * w_bytes                # W2 chunk
    b1b = 2 * 2 * tK * 4                      # b1 chunk + mix chunk
    b2b = 2 * D * 4                           # b2
    outb = 2 * tT * D * out_bytes             # output tile
    accb = tT * D * 4                         # accumulator scratch
    htmp = tT * tK * 4                        # in-kernel GELU temporary
    return xb + w1b + w2b + b1b + b2b + outb + accb + htmp


def _derive_tiles(T, D, K, *, t_target=512, k_target=512):
    """Pick (token_tile, k_tile, vmem_limit_bytes) from shapes + device VMEM."""
    cap = _vmem_capacity_bytes()
    budget = int(0.70 * cap)

    tK = _pick_k_tile(K, k_target)
    tT = min(t_target, _round_up(T, 16))      # 16: bf16 sublane packing
    # Megacore: keep >= 2 token tiles when there is enough work so the
    # "parallel" axis can actually shard across the two TensorCores on v7x.
    if T >= 32 and _round_up(T, tT) // tT < 2:
        tT = max(16, _round_up(math.ceil(T / 2), 16))

    while _footprint_bytes(tT, tK, D) > budget and tT > 16:
        tT = max(16, _round_up(tT // 2, 16))
    while (_footprint_bytes(tT, tK, D) > budget and tK > 128
           and (tK // 2) % 128 == 0 and K % (tK // 2) == 0):
        tK //= 2
    # TODO(synk): add an output-D (N) grid axis for very large D (>= 8K) so the
    # W2 chunk / accumulator / output tile stop scaling with full model width.

    vmem_limit = int(min(0.9 * cap,
                         max(1.4 * _footprint_bytes(tT, tK, D),
                             32 * 1024 * 1024)))
    return tT, tK, vmem_limit


# ------------------------------ host wrappers --------------------------------
def pack_expert_weights(w1, b1, w2, b2, *, weight_dtype=jnp.bfloat16):
    """One-time fusion of the E per-expert MLPs into a single concatenated MLP.

    Call ONCE and reuse: the weight-sized repack (and the f32->bf16 cast) never
    runs inside the per-forward jit, so it costs no HBM traffic per call."""
    E, D, H = w1.shape
    K = E * H
    w1c = jnp.transpose(w1, (1, 0, 2)).reshape(D, K).astype(weight_dtype)  # [D, K]
    b1c = b1.reshape(1, K).astype(jnp.float32)                             # [1, K]
    w2c = w2.reshape(K, D).astype(weight_dtype)                            # [K, D]
    b2e = b2.astype(jnp.float32)                                           # [E, D]
    return w1c, b1c, w2c, b2e


@functools.partial(jax.jit,
                   static_argnames=("t_tile", "k_tile", "vmem_limit_bytes",
                                    "gelu_approximate"))
def _fused_forward(x, w1c, b1c, w2c, b2e, mix, *, t_tile, k_tile,
                   vmem_limit_bytes, gelu_approximate):
    T, D = x.shape
    K = w1c.shape[1]
    E = mix.shape[0]
    H = K // E
    out_dtype = x.dtype
    out_bytes = jnp.dtype(out_dtype).itemsize

    # Tiny per-call prep (O(K) + O(E*D) bytes) — mix may change per layer/step.
    mix_f32 = mix.astype(jnp.float32)
    mix_cols = jnp.repeat(mix_f32, H).reshape(1, K)      # expert-major, matches W1cat
    b2s = (mix_f32 @ b2e).reshape(1, D)                  # sum_e mix_e * b2_e

    # bf16 activations feed the MXU at full rate; accumulation stays f32.
    xb = x.astype(jnp.bfloat16)
    Tp = _round_up(T, t_tile)
    if Tp != T:
        xb = jnp.pad(xb, ((0, Tp - T), (0, 0)))

    grid = (Tp // t_tile, K // k_tile)

    cost = pl.CostEstimate(
        flops=4 * T * K * D,
        transcendentals=T * K,
        bytes_accessed=(xb.size * 2 + w1c.size * 2 + w2c.size * 2
                        + (2 * K + E * D + D) * 4 + T * D * out_bytes))

    kernel = functools.partial(_fused_mlp_kernel,
                               gelu_approximate=gelu_approximate)

    out = pl.pallas_call(
        kernel,
        out_shape=jax.ShapeDtypeStruct((Tp, D), out_dtype),
        grid_spec=pltpu.PrefetchScalarGridSpec(
            num_scalar_prefetch=0,
            grid=grid,
            in_specs=[
                pl.BlockSpec((t_tile, D), lambda i, k: (i, 0)),   # x
                pl.BlockSpec((D, k_tile), lambda i, k: (0, k)),   # W1cat chunk
                pl.BlockSpec((1, k_tile), lambda i, k: (0, k)),   # b1cat chunk
                pl.BlockSpec((1, k_tile), lambda i, k: (0, k)),   # mix per column
                pl.BlockSpec((k_tile, D), lambda i, k: (k, 0)),   # W2cat chunk
                pl.BlockSpec((1, D), lambda i, k: (0, 0)),        # mixed b2
            ],
            out_specs=pl.BlockSpec((t_tile, D), lambda i, k: (i, 0)),
            scratch_shapes=[pltpu.VMEM((t_tile, D), jnp.float32)],
        ),
        compiler_params=pltpu.CompilerParams(
            dimension_semantics=("parallel", "arbitrary"),
            vmem_limit_bytes=vmem_limit_bytes),
        cost_estimate=cost,
    )(xb, w1c, b1c, mix_cols, w2c, b2s)

    return out[:T] if Tp != T else out


def weighted_multi_mlp(x2d, packed, mix, *, gelu_approximate=True,
                       t_target=512, k_target=512):
    """x2d: [T, D] tokens; packed = pack_expert_weights(...); mix: [E]."""
    T, D = x2d.shape
    K = packed[0].shape[1]
    t_tile, k_tile, vmem_limit = _derive_tiles(T, D, K,
                                               t_target=t_target,
                                               k_target=k_target)
    return _fused_forward(x2d, *packed, mix,
                          t_tile=t_tile, k_tile=k_tile,
                          vmem_limit_bytes=vmem_limit,
                          gelu_approximate=gelu_approximate)


# ------------------------------- reference -----------------------------------
def _reference(x, w1, b1, w2, b2, mix, *, gelu_approximate=True):
    """Literal per-expert weighted sum (the PyTorch module semantics), f32."""
    out = jnp.zeros(x.shape, dtype=jnp.float32)
    xf = x.astype(jnp.float32)
    for e in range(w1.shape[0]):
        h = jax.nn.gelu(xf @ w1[e].astype(jnp.float32) + b1[e],
                        approximate=gelu_approximate)
        y = h @ w2[e].astype(jnp.float32) + b2[e]
        out = out + mix[e] * y
    return out.astype(x.dtype)


# --------------------------------- demo ---------------------------------------
if __name__ == "__main__":
    # Small but lane-dense shapes: 3 experts, batch=2, seq=8, D=128, H=128.
    B, S, D, H, E = 2, 8, 128, 128, 3
    key = jax.random.PRNGKey(0)
    kx, kw1, kb1, kw2, kb2, kmix = jax.random.split(key, 6)

    x = jax.random.normal(kx, (B, S, D), dtype=jnp.float32)
    w1 = jax.random.normal(kw1, (E, D, H), dtype=jnp.float32) * 0.05
    b1 = jax.random.normal(kb1, (E, H), dtype=jnp.float32) * 0.05
    w2 = jax.random.normal(kw2, (E, H, D), dtype=jnp.float32) * 0.05
    b2 = jax.random.normal(kb2, (E, D), dtype=jnp.float32) * 0.05
    # self.weights.weights[self.layer_id][i].item() -> E scalar mixing weights.
    mix = jax.random.uniform(kmix, (E,), dtype=jnp.float32)

    # One-time weight fusion (static across forwards).
    packed = pack_expert_weights(w1, b1, w2, b2)

    x2d = x.reshape(B * S, D)                      # token-major layout
    out2d = weighted_multi_mlp(x2d, packed, mix)   # gelu_approximate=True (EUP);
    out = out2d.reshape(B, S, D)                   # pass False for erf parity.
    jax.block_until_ready(out)

    ref = _reference(x2d, w1, b1, w2, b2, mix).reshape(B, S, D)
    max_diff = jnp.max(jnp.abs(out.astype(jnp.float32) - ref.astype(jnp.float32)))
    # bf16 MXU path -> looser tolerance than the all-f32 variant.
    assert jnp.allclose(out, ref, atol=2e-2, rtol=2e-2), (
        f"mismatch vs reference, max abs diff = {max_diff:.3e}")

    print("KERNEL_OK")
</pallas_src>

<mosaic_0001>
module attributes {stable_mosaic.version = 11 : i64} {
  func.func @_fused_mlp_kernel(%arg0: i32, %arg1: i32, %arg2: memref<16x128xbf16, #tpu.memory_space<vmem>>, %arg3: memref<128x384xbf16, #tpu.memory_space<vmem>>, %arg4: memref<1x384xf32, #tpu.memory_space<vmem>>, %arg5: memref<1x384xf32, #tpu.memory_space<vmem>>, %arg6: memref<384x128xbf16, #tpu.memory_space<vmem>>, %arg7: memref<1x128xf32, #tpu.memory_space<vmem>>, %arg8: memref<16x128xf32, #tpu.memory_space<vmem>>, %arg9: memref<16x128xf32, #tpu.memory_space<vmem>>) attributes {dimension_semantics = [#tpu.dimension_semantics<parallel>, #tpu.dimension_semantics<arbitrary>], iteration_bounds = array<i64: 1, 1>, scalar_prefetch = 0 : i64, scratch_operands = 1 : i64, tpu.core_type = #tpu.core_type<tc>, window_params = [{transform_indices = @transform_0, window_bounds = array<i64: 16, 128>}, {transform_indices = @transform_1, window_bounds = array<i64: 128, 384>}, {transform_indices = @transform_2, window_bounds = array<i64: 1, 384>}, {transform_indices = @transform_3, window_bounds = array<i64: 1, 384>}, {transform_indices = @transform_4, window_bounds = array<i64: 384, 128>}, {pipeline_mode = #tpu.pipeline_mode<synchronous>, transform_indices = @transform_5, window_bounds = array<i64: 1, 128>}, {transform_indices = @transform_6, window_bounds = array<i64: 16, 128>}]} {
    %c0_i32 = arith.constant 0 : i32
    %0 = arith.cmpi eq, %arg1, %c0_i32 : i32
    %1 = arith.extui %0 : i1 to i32
    %c0_i32_0 = arith.constant 0 : i32
    %2 = arith.cmpi ne, %1, %c0_i32_0 : i32
    scf.if %2 {
      %cst_21 = arith.constant 0.000000e+00 : f32
      %34 = vector.broadcast %cst_21 : f32 to vector<16x128xf32>
      %c0_22 = arith.constant 0 : index
      %c0_23 = arith.constant 0 : index
      %35 = vector.load %arg9[%c0_22, %c0_23] : memref<16x128xf32, #tpu.memory_space<vmem>>, vector<16x128xf32>
      tpu.vector_store %arg9[%c0_22, %c0_23], %34 {strides = array<i32>} : memref<16x128xf32, #tpu.memory_space<vmem>>, vector<16x128xf32>,
    } else {
    }
    %c0 = arith.constant 0 : index
    %c0_1 = arith.constant 0 : index
    %3 = vector.load %arg2[%c0, %c0_1] : memref<16x128xbf16, #tpu.memory_space<vmem>>, vector<16x128xbf16>
    %c0_2 = arith.constant 0 : index
    %c0_3 = arith.constant 0 : index
    %4 = vector.load %arg3[%c0_2, %c0_3] : memref<128x384xbf16, #tpu.memory_space<vmem>>, vector<128x384xbf16>
    %cst = arith.constant dense<0.000000e+00> : vector<16x384xf32>
    %5 = tpu.matmul %3, %4, %cst {dimension_numbers = #tpu.dot_dimension_numbers<[1], [0], [0], [1], [0, 0, 1, 1], [], []>} : vector<16x128xbf16>, vector<128x384xbf16>, vector<16x384xf32> -> vector<16x384xf32>
    %c0_4 = arith.constant 0 : index
    %c0_5 = arith.constant 0 : index
    %6 = vector.load %arg4[%c0_4, %c0_5] : memref<1x384xf32, #tpu.memory_space<vmem>>, vector<1x384xf32>
    %7 = vector.broadcast %6 : vector<1x384xf32> to vector<16x384xf32>
    %8 = arith.addf %5, %7 : vector<16x384xf32>
    %9 = arith.mulf %8, %8 : vector<16x384xf32>
    %10 = arith.mulf %8, %9 : vector<16x384xf32>
    %cst_6 = arith.constant 4.471500e-02 : f32
    %11 = vector.broadcast %cst_6 : f32 to vector<16x384xf32>
    %12 = arith.mulf %11, %10 : vector<16x384xf32>
    %13 = arith.addf %8, %12 : vector<16x384xf32>
    %cst_7 = arith.constant 0.797884583 : f32
    %14 = vector.broadcast %cst_7 : f32 to vector<16x384xf32>
    %15 = arith.mulf %14, %13 : vector<16x384xf32>
    %16 = math.tanh %15 : vector<16x384xf32>
    %cst_8 = arith.constant 1.000000e+00 : f32
    %17 = vector.broadcast %cst_8 : f32 to vector<16x384xf32>
    %18 = arith.addf %17, %16 : vector<16x384xf32>
    %cst_9 = arith.constant 5.000000e-01 : f32
    %19 = vector.broadcast %cst_9 : f32 to vector<16x384xf32>
    %20 = arith.mulf %19, %18 : vector<16x384xf32>
    %21 = arith.mulf %8, %20 : vector<16x384xf32>
    %c0_10 = arith.constant 0 : index
    %c0_11 = arith.constant 0 : index
    %22 = vector.load %arg5[%c0_10, %c0_11] : memref<1x384xf32, #tpu.memory_space<vmem>>, vector<1x384xf32>
    %23 = vector.broadcast %22 : vector<1x384xf32> to vector<16x384xf32>
    %24 = arith.mulf %21, %23 : vector<16x384xf32>
    %c0_12 = arith.constant 0 : index
    %c0_13 = arith.constant 0 : index
    %25 = vector.load %arg9[%c0_12, %c0_13] : memref<16x128xf32, #tpu.memory_space<vmem>>, vector<16x128xf32>
    %26 = arith.truncf %24 : vector<16x384xf32> to vector<16x384xbf16>
    %c0_14 = arith.constant 0 : index
    %c0_15 = arith.constant 0 : index
    %27 = vector.load %arg6[%c0_14, %c0_15] : memref<384x128xbf16, #tpu.memory_space<vmem>>, vector<384x128xbf16>
    %cst_16 = arith.constant dense<0.000000e+00> : vector<16x128xf32>
    %28 = tpu.matmul %26, %27, %cst_16 {dimension_numbers = #tpu.dot_dimension_numbers<[1], [0], [0], [1], [0, 0, 1, 1], [], []>} : vector<16x384xbf16>, vector<384x128xbf16>, vector<16x128xf32> -> vector<16x128xf32>
    %29 = arith.addf %25, %28 : vector<16x128xf32>
    %c0_17 = arith.constant 0 : index
    %c0_18 = arith.constant 0 : index
    %30 = vector.load %arg9[%c0_17, %c0_18] : memref<16x128xf32, #tpu.memory_space<vmem>>, vector<16x128xf32>
    tpu.vector_store %arg9[%c0_17, %c0_18], %29 {strides = array<i32>} : memref<16x128xf32, #tpu.memory_space<vmem>>, vector<16x128xf32>,
    %c0_i32_19 = arith.constant 0 : i32
    %31 = arith.cmpi eq, %arg1, %c0_i32_19 : i32
    %32 = arith.extui %31 : i1 to i32
    %c0_i32_20 = arith.constant 0 : i32
    %33 = arith.cmpi ne, %32, %c0_i32_20 : i32
    scf.if %33 {
      %c0_21 = arith.constant 0 : index
      %c0_22 = arith.constant 0 : index
      %34 = vector.load %arg9[%c0_21, %c0_22] : memref<16x128xf32, #tpu.memory_space<vmem>>, vector<16x128xf32>
      %c0_23 = arith.constant 0 : index
      %c0_24 = arith.constant 0 : index
      %35 = vector.load %arg7[%c0_23, %c0_24] : memref<1x128xf32, #tpu.memory_space<vmem>>, vector<1x128xf32>
      %36 = vector.broadcast %35 : vector<1x128xf32> to vector<16x128xf32>
      %37 = arith.addf %34, %36 : vector<16x128xf32>
      %c0_25 = arith.constant 0 : index
      %c0_26 = arith.constant 0 : index
      %38 = vector.load %arg8[%c0_25, %c0_26] : memref<16x128xf32, #tpu.memory_space<vmem>>, vector<16x128xf32>
      tpu.vector_store %arg8[%c0_25, %c0_26], %37 {strides = array<i32>} : memref<16x128xf32, #tpu.memory_space<vmem>>, vector<16x128xf32>,
    } else {
    }
    return
  }
  func.func @transform_0(%arg0: i32, %arg1: i32) -> (i32, i32) {
    %c0_i32 = arith.constant 0 : i32
    %c0_i32_0 = arith.constant 0 : i32
    return %arg0, %c0_i32 : i32, i32
  }
  func.func @transform_1(%arg0: i32, %arg1: i32) -> (i32, i32) {
    %c0_i32 = arith.constant 0 : i32
    %c0_i32_0 = arith.constant 0 : i32
    return %c0_i32, %arg1 : i32, i32
  }
  func.func @transform_2(%arg0: i32, %arg1: i32) -> (i32, i32) {
    %c0_i32 = arith.constant 0 : i32
    %c0_i32_0 = arith.constant 0 : i32
    return %c0_i32, %arg1 : i32, i32
  }
  func.func @transform_3(%arg0: i32, %arg1: i32) -> (i32, i32) {
    %c0_i32 = arith.constant 0 : i32
    %c0_i32_0 = arith.constant 0 : i32
    return %c0_i32, %arg1 : i32, i32
  }
  func.func @transform_4(%arg0: i32, %arg1: i32) -> (i32, i32) {
    %c0_i32 = arith.constant 0 : i32
    %c0_i32_0 = arith.constant 0 : i32
    return %arg1, %c0_i32 : i32, i32
  }
  func.func @transform_5(%arg0: i32, %arg1: i32) -> (i32, i32) {
    %c0_i32 = arith.constant 0 : i32
    %c0_i32_0 = arith.constant 0 : i32
    %c0_i32_1 = arith.constant 0 : i32
    return %c0_i32, %c0_i32_0 : i32, i32
  }
  func.func @transform_6(%arg0: i32, %arg1: i32) -> (i32, i32) {
    %c0_i32 = arith.constant 0 : i32
    %c0_i32_0 = arith.constant 0 : i32
    return %arg0, %c0_i32 : i32, i32
  }
}

</mosaic_0001>

<llo_original>
// kernel: _fused_forward.1
$region0: #{_fused_forward.1}
  #allocation0 [shape = 'u32[]', space=smem, size = 0x4, offset = 0x4, fixed_abs, tag = 'smem constant byte address 0x4 - core index']
  #allocation1 [shape = 'u32[144,128]{1,0:T(1,128)}', space=vmem, size = 0x12000, scoped, tag = 'internal scratch']
  #allocation2 [shape = 'f32[16,128]{1,0:T(8,128)}', space=vmem, size = 0x2000, scoped, tag = 'scratch operand']
  %s0 = inlined_call_operand.vmem [shape: bf16[16,128], index: 0, kind: input, shape index: {}]
  %s1 = inlined_call_operand.hbm [shape: bf16[128,384], index: 1, kind: input, shape index: {}]
  %s2 = inlined_call_operand.vmem [shape: f32[1,384], index: 2, kind: input, shape index: {}]
  %s3 = inlined_call_operand.vmem [shape: f32[1,384], index: 3, kind: input, shape index: {}]
  %s4 = inlined_call_operand.hbm [shape: bf16[384,128], index: 4, kind: input, shape index: {}]
  %s5 = inlined_call_operand.vmem [shape: f32[1,128], index: 5, kind: input, shape index: {}]
  %s6 = inlined_call_operand.hbm [shape: f32[16,128], index: 6, kind: output, shape index: {}]
  %s7 = sld [smem:[#allocation0]]
  $region50: #{_fused_forward.1} parent=0
    _
  %s9 = ssub.s32 1, %s7
  %s10 = scalar_select 0, %s9, %s7
  $region1: #{_fused_forward.1} parent=0
    #allocation3 [shape = 'u8[98304]{0}', space=vmem, size = 0x18000, scoped, tag = 'input window, operand 1, single buffered']
    #allocation4 [shape = 's32[1]{0}', space=sflag, size = 0x4, scoped, tag = 'scoped memory for _fused_forward.1']
    #allocation5 [shape = 's32[1]{0}', space=sflag, size = 0x4, scoped, tag = 'scoped memory for _fused_forward.1']
    #allocation6 [shape = 'u8[98304]{0}', space=vmem, size = 0x18000, scoped, tag = 'input window, operand 4, single buffered']
    #allocation7 [shape = 's32[1]{0}', space=sflag, size = 0x4, scoped, tag = 'scoped memory for _fused_forward.1']
    #allocation8 [shape = 'u8[8192]{0}', space=vmem, size = 0x2000, scoped, tag = 'output window, operand 0, single buffered']
    %11 = vsyncpa [#allocation4], 0
    %12 = vsyncpa [#allocation7], 0
    %13 = vsyncpa [#allocation5], 0
    // Predicated region
    $region2: #{_fused_forward.1} parent=1 // pred_check
      _
    $region3: #{_fused_forward.1} parent=1 // pred_check_branch
      %15 = sbr.rel (0) target = $region5
    $region4: #{_fused_forward.1} parent=1 // pred_region
      _
    $region5: #{_fused_forward.1} parent=1 // pred_fallthru
      _
    // Predicated region
    $region6: #{_fused_forward.1} parent=1 // pred_check
      _
    $region7: #{_fused_forward.1} parent=1 // pred_check_branch
      %17 = sbr.rel (0) target = $region9
    $region8: #{_fused_forward.1} parent=1 // pred_region
      %s19 = ssub.s32 3072, 3072
      %20 = vsyncadd [#allocation4], %s19
      %s21 = sshll.u32 [#allocation3], 4
      %s22 = int_to_ptr.vmem [resolvable:$true] %s21
      %27 = dma.hbm_to_vmem [thread:$0]  %s1, 3072, %s22, [#allocation4], 192, 192, 12
    $region9: #{_fused_forward.1} parent=1 // pred_fallthru
      _
    // Predicated region
    $region10: #{_fused_forward.1} parent=1 // pred_check
      _
    $region11: #{_fused_forward.1} parent=1 // pred_check_branch
      %29 = sbr.rel (0) target = $region13
    $region12: #{_fused_forward.1} parent=1 // pred_region
      _
    $region13: #{_fused_forward.1} parent=1 // pred_fallthru
      _
    // Predicated region
    $region14: #{_fused_forward.1} parent=1 // pred_check
      _
    $region15: #{_fused_forward.1} parent=1 // pred_check_branch
      %31 = sbr.rel (0) target = $region17
    $region16: #{_fused_forward.1} parent=1 // pred_region
      _
    $region17: #{_fused_forward.1} parent=1 // pred_fallthru
      _
    // Predicated region
    $region18: #{_fused_forward.1} parent=1 // pred_check
      _
    $region19: #{_fused_forward.1} parent=1 // pred_check_branch
      %33 = sbr.rel (0) target = $region21
    $region20: #{_fused_forward.1} parent=1 // pred_region
      %s35 = ssub.s32 3072, 3072
      %36 = vsyncadd [#allocation7], %s35
      %s37 = sshll.u32 [#allocation6], 4
      %s38 = int_to_ptr.vmem [resolvable:$true] %s37
      %43 = dma.hbm_to_vmem [thread:$0]  %s4, 3072, %s38, [#allocation7], 64, 64, 4
    $region21: #{_fused_forward.1} parent=1 // pred_fallthru
      _
    // Predicated region
    $region22: #{_fused_forward.1} parent=1 // pred_check
      _
    $region23: #{_fused_forward.1} parent=1 // pred_check_branch
      %45 = sbr.rel (0) target = $region25
    $region24: #{_fused_forward.1} parent=1 // pred_region
      _
    $region25: #{_fused_forward.1} parent=1 // pred_fallthru
      _
    // Predicated region
    $region26: #{_fused_forward.1} parent=1 // pred_check
      _
    $region27: #{_fused_forward.1} parent=1 // pred_check_branch
      %47 = sbr.rel (0) target = $region29
    $region28: #{_fused_forward.1} parent=1 // pred_region
      %48 = dma.done [#allocation4], 3072
    $region29: #{_fused_forward.1} parent=1 // pred_fallthru
      _
    // Predicated region
    $region30: #{_fused_forward.1} parent=1 // pred_check
      _
    $region31: #{_fused_forward.1} parent=1 // pred_check_branch
      %50 = sbr.rel (0) target = $region33
    $region32: #{_fused_forward.1} parent=1 // pred_region
      %51 = dma.done [#allocation7], 3072
    $region33: #{_fused_forward.1} parent=1 // pred_fallthru
      _
    %p53 = scmp.eq.s32.totalorder 0, 0
    // Predicated region
    $region34: #{_fused_forward.1} parent=1 // pred_check
      %p54 = pneg %p53
    $region35: #{_fused_forward.1} parent=1 // pred_check_branch
      %56 = sbr.rel (%p54) target = $region37
    $region36: #{_fused_forward.1} parent=1 // pred_region
      %57 = vst [vmem:[#allocation2] sm:$0xff] 0.0
      %58 = vst [vmem:[#allocation2 + $0x8] sm:$0xff] 0.0
    $region37: #{_fused_forward.1} parent=1 // pred_fallthru
      _
    %v59 = vld [vmem:[%s0] sm:$0xf]
    %v60 = vld [vmem:[%s0 + $0x4] sm:$0xf]
    %v61 = vld [vmem:[#allocation3] sm:$0xff]
    %v62 = vld [vmem:[#allocation3 + $0x8] sm:$0xf]
    %v63 = vld [vmem:[#allocation3 + $0xc] sm:$0xff]
    %v64 = vld [vmem:[#allocation3 + $0x14] sm:$0xf]
    %v65 = vld [vmem:[#allocation3 + $0x18] sm:$0xff]
    %v66 = vld [vmem:[#allocation3 + $0x20] sm:$0xf]
    %v67 = vld [vmem:[#allocation3 + $0x24] sm:$0xff]
    %v68 = vld [vmem:[#allocation3 + $0x2c] sm:$0xf]
    %v69 = vld [vmem:[#allocation3 + $0x30] sm:$0xff]
    %v70 = vld [vmem:[#allocation3 + $0x38] sm:$0xf]
    %v71 = vld [vmem:[#allocation3 + $0x3c] sm:$0xff]
    %v72 = vld [vmem:[#allocation3 + $0x44] sm:$0xf]
    %v73 = vld [vmem:[#allocation3 + $0x48] sm:$0xff]
    %v74 = vld [vmem:[#allocation3 + $0x50] sm:$0xf]
    %v75 = vld [vmem:[#allocation3 + $0x54] sm:$0xff]
    %v76 = vld [vmem:[#allocation3 + $0x5c] sm:$0xf]
    %v77 = vld [vmem:[#allocation3 + $0x60] sm:$0xff]
    %v78 = vld [vmem:[#allocation3 + $0x68] sm:$0xf]
    %v79 = vld [vmem:[#allocation3 + $0x6c] sm:$0xff]
    %v80 = vld [vmem:[#allocation3 + $0x74] sm:$0xf]
    %v81 = vld [vmem:[#allocation3 + $0x78] sm:$0xff]
    %v82 = vld [vmem:[#allocation3 + $0x80] sm:$0xf]
    %v83 = vld [vmem:[#allocation3 + $0x84] sm:$0xff]
    %v84 = vld [vmem:[#allocation3 + $0x8c] sm:$0xf]
    %v85 = vld [vmem:[#allocation3 + $0x90] sm:$0xff]
    %v86 = vld [vmem:[#allocation3 + $0x98] sm:$0xf]
    %v87 = vld [vmem:[#allocation3 + $0x9c] sm:$0xff]
    %v88 = vld [vmem:[#allocation3 + $0xa4] sm:$0xf]
    %v89 = vld [vmem:[#allocation3 + $0xa8] sm:$0xff]
    %v90 = vld [vmem:[#allocation3 + $0xb0] sm:$0xf]
    %v91 = vld [vmem:[#allocation3 + $0xb4] sm:$0xff]
    %v92 = vld [vmem:[#allocation3 + $0xbc] sm:$0xf]
    %v93 = vld [vmem:[%s2] sm:$0x7]
    %v95 = vlaneseq
    %v96 = vshrl.u32 %v95, 7
    %v97 = vsub.s32 0, %v96
    %v98 = vrot.slane %v93, %v97
    %v99 = vlaneseq
    %v100 = vshrl.u32 %v99, 7
    %v101 = vsub.s32 1, %v100
    %v102 = vrot.slane %v93, %v101
    %v103 = vlaneseq
    %v104 = vshrl.u32 %v103, 7
    %v105 = vsub.s32 2, %v104
    %v106 = vrot.slane %v93, %v105
    %v112 = vunpack.c.l.b16 %v59
    %v113 = vunpack.c.l.b16 %v60
    %v114 = vpack.c.b16 %v113, %v112
    %v148 = vunpack.c.l.b16 %v61
    %v149 = vunpack.c.h.b16 %v61
    %v150 = vunpack.c.l.b16 %v62
    %v151 = vunpack.c.l.b16 %v63
    %v152 = vunpack.c.h.b16 %v63
    %v153 = vunpack.c.l.b16 %v64
    %v154 = vunpack.c.l.b16 %v65
    %v155 = vunpack.c.h.b16 %v65
    %v156 = vunpack.c.l.b16 %v66
    %v157 = vunpack.c.l.b16 %v67
    %v158 = vunpack.c.h.b16 %v67
    %v159 = vunpack.c.l.b16 %v68
    %v160 = vunpack.c.l.b16 %v69
    %v161 = vunpack.c.h.b16 %v69
    %v162 = vunpack.c.l.b16 %v70
    %v163 = vunpack.c.l.b16 %v71
    %v164 = vunpack.c.h.b16 %v71
    %v165 = vunpack.c.l.b16 %v72
    %v166 = vunpack.c.l.b16 %v73
    %v167 = vunpack.c.h.b16 %v73
    %v168 = vunpack.c.l.b16 %v74
    %v169 = vunpack.c.l.b16 %v75
    %v170 = vunpack.c.h.b16 %v75
    %v171 = vunpack.c.l.b16 %v76
    %v172 = vunpack.c.l.b16 %v77
    %v173 = vunpack.c.h.b16 %v77
    %v174 = vunpack.c.l.b16 %v78
    %v175 = vunpack.c.l.b16 %v79
    %v176 = vunpack.c.h.b16 %v79
    %v177 = vunpack.c.l.b16 %v80
    %v178 = vunpack.c.l.b16 %v81
    %v179 = vunpack.c.h.b16 %v81
    %v180 = vunpack.c.l.b16 %v82
    %v181 = vunpack.c.l.b16 %v83
    %v182 = vunpack.c.h.b16 %v83
    %v183 = vunpack.c.l.b16 %v84
    %v184 = vunpack.c.l.b16 %v85
    %v185 = vunpack.c.h.b16 %v85
    %v186 = vunpack.c.l.b16 %v86
    %v187 = vunpack.c.l.b16 %v87
    %v188 = vunpack.c.h.b16 %v87
    %v189 = vunpack.c.l.b16 %v88
    %v190 = vunpack.c.l.b16 %v89
    %v191 = vunpack.c.h.b16 %v89
    %v192 = vunpack.c.l.b16 %v90
    %v193 = vunpack.c.l.b16 %v91
    %v194 = vunpack.c.h.b16 %v91
    %v195 = vunpack.c.l.b16 %v92
    %v196 = vpack.c.b16 %v151, %v148
    %v197 = vpack.c.b16 %v152, %v149
    %v198 = vpack.c.b16 %v153, %v150
    %v199 = vpack.c.b16 %v157, %v154
    %v200 = vpack.c.b16 %v158, %v155
    %v201 = vpack.c.b16 %v159, %v156
    %v202 = vpack.c.b16 %v163, %v160
    %v203 = vpack.c.b16 %v164, %v161
    %v204 = vpack.c.b16 %v165, %v162
    %v205 = vpack.c.b16 %v169, %v166
    %v206 = vpack.c.b16 %v170, %v167
    %v207 = vpack.c.b16 %v171, %v168
    %v208 = vpack.c.b16 %v175, %v172
    %v209 = vpack.c.b16 %v176, %v173
    %v210 = vpack.c.b16 %v177, %v174
    %v211 = vpack.c.b16 %v181, %v178
    %v212 = vpack.c.b16 %v182, %v179
    %v213 = vpack.c.b16 %v183, %v180
    %v214 = vpack.c.b16 %v187, %v184
    %v215 = vpack.c.b16 %v188, %v185
    %v216 = vpack.c.b16 %v189, %v186
    %v217 = vpack.c.b16 %v193, %v190
    %v218 = vpack.c.b16 %v194, %v191
    %v219 = vpack.c.b16 %v195, %v192
    %244 = vmatprep.subr.bf16.mxu0 %v218
    %245 = vmatpush1.bf16.msra.mxu0 %v217
    %246 = vmatprep.subr.bf16.mxu0 %v215
    %247 = vmatpush1.bf16.msra.mxu0 %v214
    %248 = vmatprep.subr.bf16.mxu0 %v212
    %249 = vmatpush1.bf16.msra.mxu0 %v211
    %250 = vmatprep.subr.bf16.mxu0 %v209
    %251 = vmatpush1.bf16.msra.mxu0 %v208
    %252 = vmatprep.subr.bf16.mxu0 %v206
    %253 = vmatpush1.bf16.msra.mxu0 %v205
    %254 = vmatprep.subr.bf16.mxu0 %v203
    %255 = vmatpush1.bf16.msra.mxu0 %v202
    %256 = vmatprep.subr.bf16.mxu0 %v200
    %257 = vmatpush1.bf16.msra.mxu0 %v199
    %258 = vmatprep.subr.bf16.mxu0 %v197
    %259 = vmatpush1.bf16.msra.mxu0 %v196
    %260 = vmatprep.subr.bf16.mxu0 0
    %261 = vmatpush2.bf16.msra.mxu0 0
    %262 = vmatprep.subr.bf16.mxu0 0
    %263 = vmatpush2.bf16.msra.mxu0 0
    %264 = vmatprep.subr.bf16.mxu0 0
    %265 = vmatpush2.bf16.msra.mxu0 0
    %266 = vmatprep.subr.bf16.mxu0 0
    %267 = vmatpush2.bf16.msra.mxu0 0
    %268 = vmatprep.subr.bf16.mxu0 0
    %269 = vmatpush2.bf16.msra.mxu0 0
    %270 = vmatprep.subr.bf16.mxu0 0
    %271 = vmatpush2.bf16.msra.mxu0 0
    %272 = vmatprep.subr.bf16.mxu0 0
    %273 = vmatpush2.bf16.msra.mxu0 0
    %274 = vmatprep.subr.bf16.mxu0 0
    %275 = vmatpush2.bf16.msra.mxu0 0
    %276 = vmatprep.mubr.bf16.mxu0 0
    %277 = vmatmul.mubr.bf16.gmra.mxu0 %v114
    %v278 = vpop.f32.mrf.mxu0
    %v279 = vadd.f32 %v98, %v278
    %v280 = vpop.f32.mrf.mxu0
    %v281 = vadd.f32 %v102, %v280
    %v282 = vpop.f32.mrf.mxu0
    %v283 = vadd.f32 %v98, %v282
    %v284 = vpop.f32.mrf.mxu0
    %v285 = vadd.f32 %v102, %v284
    %286 = vdwg.mxu0
    %287 = vmatprep.subr.bf16.mxu0 0
    %288 = vmatpush1.bf16.msra.mxu0 %v219
    %289 = vmatprep.subr.bf16.mxu0 0
    %290 = vmatpush1.bf16.msra.mxu0 %v216
    %291 = vmatprep.subr.bf16.mxu0 0
    %292 = vmatpush1.bf16.msra.mxu0 %v213
    %293 = vmatprep.subr.bf16.mxu0 0
    %294 = vmatpush1.bf16.msra.mxu0 %v210
    %295 = vmatprep.subr.bf16.mxu0 0
    %296 = vmatpush1.bf16.msra.mxu0 %v207
    %297 = vmatprep.subr.bf16.mxu0 0
    %298 = vmatpush1.bf16.msra.mxu0 %v204
    %299 = vmatprep.subr.bf16.mxu0 0
    %300 = vmatpush1.bf16.msra.mxu0 %v201
    %301 = vmatprep.subr.bf16.mxu0 0
    %302 = vmatpush1.bf16.msra.mxu0 %v198
    %303 = vmatprep.subr.bf16.mxu0 0
    %304 = vmatpush2.bf16.msra.mxu0 0
    %305 = vmatprep.subr.bf16.mxu0 0
    %306 = vmatpush2.bf16.msra.mxu0 0
    %307 = vmatprep.subr.bf16.mxu0 0
    %308 = vmatpush2.bf16.msra.mxu0 0
    %309 = vmatprep.subr.bf16.mxu0 0
    %310 = vmatpush2.bf16.msra.mxu0 0
    %311 = vmatprep.subr.bf16.mxu0 0
    %312 = vmatpush2.bf16.msra.mxu0 0
    %313 = vmatprep.subr.bf16.mxu0 0
    %314 = vmatpush2.bf16.msra.mxu0 0
    %315 = vmatprep.subr.bf16.mxu0 0
    %316 = vmatpush2.bf16.msra.mxu0 0
    %317 = vmatprep.subr.bf16.mxu0 0
    %318 = vmatpush2.bf16.msra.mxu0 0
    %319 = vmatprep.mubr.bf16.mxu0 0
    %320 = vmatmul.mubr.bf16.gmra.mxu0 %v114
    %v321 = vpop.f32.mrf.mxu0
    %v322 = vadd.f32 %v106, %v321
    %v323 = vpop.f32.mrf.mxu0
    %v324 = vpop.f32.mrf.mxu0
    %v325 = vadd.f32 %v106, %v324
    %v326 = vpop.f32.mrf.mxu0
    %327 = vdwg.mxu0
    %v328 = vmul.f32 %v279, %v279
    %v329 = vmul.f32 %v281, %v281
    %v330 = vmul.f32 %v322, %v322
    %v331 = vmul.f32 %v283, %v283
    %v332 = vmul.f32 %v285, %v285
    %v333 = vmul.f32 %v325, %v325
    %v334 = vmul.f32 %v279, %v328
    %v335 = vmul.f32 %v281, %v329
    %v336 = vmul.f32 %v322, %v330
    %v337 = vmul.f32 %v283, %v331
    %v338 = vmul.f32 %v285, %v332
    %v339 = vmul.f32 %v325, %v333
    %v340 = vmul.f32 %v334, 0.044715
    %v341 = vmul.f32 %v335, 0.044715
    %v342 = vmul.f32 %v336, 0.044715
    %v343 = vmul.f32 %v337, 0.044715
    %v344 = vmul.f32 %v338, 0.044715
    %v345 = vmul.f32 %v339, 0.044715
    %v346 = vadd.f32 %v279, %v340
    %v347 = vadd.f32 %v281, %v341
    %v348 = vadd.f32 %v322, %v342
    %v349 = vadd.f32 %v283, %v343
    %v350 = vadd.f32 %v285, %v344
    %v351 = vadd.f32 %v325, %v345
    %v352 = vmul.f32 %v346, 0.7978846
    %v353 = vmul.f32 %v347, 0.7978846
    %v354 = vmul.f32 %v348, 0.7978846
    %v355 = vmul.f32 %v349, 0.7978846
    %v356 = vmul.f32 %v350, 0.7978846
    %v357 = vmul.f32 %v351, 0.7978846
    %v358 = vtanh.pop %v352
    %v359 = vtanh.pop %v353
    %v360 = vtanh.pop %v354
    %v361 = vtanh.pop %v355
    %v362 = vtanh.pop %v356
    %v363 = vtanh.pop %v357
    %v364 = vadd.f32 %v358, 1.0
    %v365 = vadd.f32 %v359, 1.0
    %v366 = vadd.f32 %v360, 1.0
    %v367 = vadd.f32 %v361, 1.0
    %v368 = vadd.f32 %v362, 1.0
    %v369 = vadd.f32 %v363, 1.0
    %v370 = vmul.f32 %v364, 0.5
    %v371 = vmul.f32 %v365, 0.5
    %v372 = vmul.f32 %v366, 0.5
    %v373 = vmul.f32 %v367, 0.5
    %v374 = vmul.f32 %v368, 0.5
    %v375 = vmul.f32 %v369, 0.5
    %v376 = vmul.f32 %v279, %v370
    %v377 = vmul.f32 %v281, %v371
    %v378 = vmul.f32 %v322, %v372
    %v379 = vmul.f32 %v283, %v373
    %v380 = vmul.f32 %v285, %v374
    %v381 = vmul.f32 %v325, %v375
    %v382 = vld [vmem:[%s3] sm:$0x7]
    %v384 = vlaneseq
    %v385 = vshrl.u32 %v384, 7
    %v386 = vsub.s32 0, %v385
    %v387 = vrot.slane %v382, %v386
    %v388 = vlaneseq
    %v389 = vshrl.u32 %v388, 7
    %v390 = vsub.s32 1, %v389
    %v391 = vrot.slane %v382, %v390
    %v392 = vlaneseq
    %v393 = vshrl.u32 %v392, 7
    %v394 = vsub.s32 2, %v393
    %v395 = vrot.slane %v382, %v394
    %v399 = vmul.f32 %v376, %v387
    %v400 = vmul.f32 %v377, %v391
    %v401 = vmul.f32 %v378, %v395
    %v402 = vmul.f32 %v379, %v387
    %v403 = vmul.f32 %v380, %v391
    %v404 = vmul.f32 %v381, %v395
    %v405 = vld [vmem:[#allocation2] sm:$0xff]
    %v406 = vld [vmem:[#allocation2 + $0x8] sm:$0xff]
    %v407 = vpack.c.bf16 %v402, %v399
    %v408 = vpack.c.bf16 %v403, %v400
    %v409 = vpack.c.bf16 %v404, %v401
    %v410 = vld [vmem:[#allocation6] sm:$0xf]
    %v411 = vld [vmem:[#allocation6 + $0x4] sm:$0xf]
    %v412 = vld [vmem:[#allocation6 + $0x8] sm:$0xf]
    %v413 = vld [vmem:[#allocation6 + $0xc] sm:$0xf]
    %v414 = vld [vmem:[#allocation6 + $0x10] sm:$0xf]
    %v415 = vld [vmem:[#allocation6 + $0x14] sm:$0xf]
    %v416 = vld [vmem:[#allocation6 + $0x18] sm:$0xf]
    %v417 = vld [vmem:[#allocation6 + $0x1c] sm:$0xf]
    %v418 = vld [vmem:[#allocation6 + $0x20] sm:$0xf]
    %v419 = vld [vmem:[#allocation6 + $0x24] sm:$0xf]
    %v420 = vld [vmem:[#allocation6 + $0x28] sm:$0xf]
    %v421 = vld [vmem:[#allocation6 + $0x2c] sm:$0xf]
    %v422 = vld [vmem:[#allocation6 + $0x30] sm:$0xf]
    %v423 = vld [vmem:[#allocation6 + $0x34] sm:$0xf]
    %v424 = vld [vmem:[#allocation6 + $0x38] sm:$0xf]
    %v425 = vld [vmem:[#allocation6 + $0x3c] sm:$0xf]
    %v426 = vld [vmem:[#allocation6 + $0x40] sm:$0xf]
    %v427 = vld [vmem:[#allocation6 + $0x44] sm:$0xf]
    %v428 = vld [vmem:[#allocation6 + $0x48] sm:$0xf]
    %v429 = vld [vmem:[#allocation6 + $0x4c] sm:$0xf]
    %v430 = vld [vmem:[#allocation6 + $0x50] sm:$0xf]
    %v431 = vld [vmem:[#allocation6 + $0x54] sm:$0xf]
    %v432 = vld [vmem:[#allocation6 + $0x58] sm:$0xf]
    %v433 = vld [vmem:[#allocation6 + $0x5c] sm:$0xf]
    %v434 = vld [vmem:[#allocation6 + $0x60] sm:$0xf]
    %v435 = vld [vmem:[#allocation6 + $0x64] sm:$0xf]
    %v436 = vld [vmem:[#allocation6 + $0x68] sm:$0xf]
    %v437 = vld [vmem:[#allocation6 + $0x6c] sm:$0xf]
    %v438 = vld [vmem:[#allocation6 + $0x70] sm:$0xf]
    %v439 = vld [vmem:[#allocation6 + $0x74] sm:$0xf]
    %v440 = vld [vmem:[#allocation6 + $0x78] sm:$0xf]
    %v441 = vld [vmem:[#allocation6 + $0x7c] sm:$0xf]
    %v442 = vld [vmem:[#allocation6 + $0x80] sm:$0xf]
    %v443 = vld [vmem:[#allocation6 + $0x84] sm:$0xf]
    %v444 = vld [vmem:[#allocation6 + $0x88] sm:$0xf]
    %v445 = vld [vmem:[#allocation6 + $0x8c] sm:$0xf]
    %v446 = vld [vmem:[#allocation6 + $0x90] sm:$0xf]
    %v447 = vld [vmem:[#allocation6 + $0x94] sm:$0xf]
    %v448 = vld [vmem:[#allocation6 + $0x98] sm:$0xf]
    %v449 = vld [vmem:[#allocation6 + $0x9c] sm:$0xf]
    %v450 = vld [vmem:[#allocation6 + $0xa0] sm:$0xf]
    %v451 = vld [vmem:[#allocation6 + $0xa4] sm:$0xf]
    %v452 = vld [vmem:[#allocation6 + $0xa8] sm:$0xf]
    %v453 = vld [vmem:[#allocation6 + $0xac] sm:$0xf]
    %v454 = vld [vmem:[#allocation6 + $0xb0] sm:$0xf]
    %v455 = vld [vmem:[#allocation6 + $0xb4] sm:$0xf]
    %v456 = vld [vmem:[#allocation6 + $0xb8] sm:$0xf]
    %v457 = vld [vmem:[#allocation6 + $0xbc] sm:$0xf]
    %v506 = vunpack.c.l.b16 %v410
    %v507 = vunpack.c.l.b16 %v411
    %v508 = vunpack.c.l.b16 %v412
    %v509 = vunpack.c.l.b16 %v413
    %v510 = vunpack.c.l.b16 %v414
    %v511 = vunpack.c.l.b16 %v415
    %v512 = vunpack.c.l.b16 %v416
    %v513 = vunpack.c.l.b16 %v417
    %v514 = vunpack.c.l.b16 %v418
    %v515 = vunpack.c.l.b16 %v419
    %v516 = vunpack.c.l.b16 %v420
    %v517 = vunpack.c.l.b16 %v421
    %v518 = vunpack.c.l.b16 %v422
    %v519 = vunpack.c.l.b16 %v423
    %v520 = vunpack.c.l.b16 %v424
    %v521 = vunpack.c.l.b16 %v425
    %v522 = vunpack.c.l.b16 %v426
    %v523 = vunpack.c.l.b16 %v427
    %v524 = vunpack.c.l.b16 %v428
    %v525 = vunpack.c.l.b16 %v429
    %v526 = vunpack.c.l.b16 %v430
    %v527 = vunpack.c.l.b16 %v431
    %v528 = vunpack.c.l.b16 %v432
    %v529 = vunpack.c.l.b16 %v433
    %v530 = vunpack.c.l.b16 %v434
    %v531 = vunpack.c.l.b16 %v435
    %v532 = vunpack.c.l.b16 %v436
    %v533 = vunpack.c.l.b16 %v437
    %v534 = vunpack.c.l.b16 %v438
    %v535 = vunpack.c.l.b16 %v439
    %v536 = vunpack.c.l.b16 %v440
    %v537 = vunpack.c.l.b16 %v441
    %v538 = vunpack.c.l.b16 %v442
    %v539 = vunpack.c.l.b16 %v443
    %v540 = vunpack.c.l.b16 %v444
    %v541 = vunpack.c.l.b16 %v445
    %v542 = vunpack.c.l.b16 %v446
    %v543 = vunpack.c.l.b16 %v447
    %v544 = vunpack.c.l.b16 %v448
    %v545 = vunpack.c.l.b16 %v449
    %v546 = vunpack.c.l.b16 %v450
    %v547 = vunpack.c.l.b16 %v451
    %v548 = vunpack.c.l.b16 %v452
    %v549 = vunpack.c.l.b16 %v453
    %v550 = vunpack.c.l.b16 %v454
    %v551 = vunpack.c.l.b16 %v455
    %v552 = vunpack.c.l.b16 %v456
    %v553 = vunpack.c.l.b16 %v457
    %v554 = vpack.c.b16 %v507, %v506
    %v555 = vpack.c.b16 %v509, %v508
    %v556 = vpack.c.b16 %v511, %v510
    %v557 = vpack.c.b16 %v513, %v512
    %v558 = vpack.c.b16 %v515, %v514
    %v559 = vpack.c.b16 %v517, %v516
    %v560 = vpack.c.b16 %v519, %v518
    %v561 = vpack.c.b16 %v521, %v520
    %v562 = vpack.c.b16 %v523, %v522
    %v563 = vpack.c.b16 %v525, %v524
    %v564 = vpack.c.b16 %v527, %v526
    %v565 = vpack.c.b16 %v529, %v528
    %v566 = vpack.c.b16 %v531, %v530
    %v567 = vpack.c.b16 %v533, %v532
    %v568 = vpack.c.b16 %v535, %v534
    %v569 = vpack.c.b16 %v537, %v536
    %v570 = vpack.c.b16 %v539, %v538
    %v571 = vpack.c.b16 %v541, %v540
    %v572 = vpack.c.b16 %v543, %v542
    %v573 = vpack.c.b16 %v545, %v544
    %v574 = vpack.c.b16 %v547, %v546
    %v575 = vpack.c.b16 %v549, %v548
    %v576 = vpack.c.b16 %v551, %v550
    %v577 = vpack.c.b16 %v553, %v552
    %602 = vmatprep.subr.bf16.mxu0 0
    %603 = vmatpush1.bf16.msra.mxu0 %v561
    %604 = vmatprep.subr.bf16.mxu0 0
    %605 = vmatpush1.bf16.msra.mxu0 %v560
    %606 = vmatprep.subr.bf16.mxu0 0
    %607 = vmatpush1.bf16.msra.mxu0 %v559
    %608 = vmatprep.subr.bf16.mxu0 0
    %609 = vmatpush1.bf16.msra.mxu0 %v558
    %610 = vmatprep.subr.bf16.mxu0 0
    %611 = vmatpush1.bf16.msra.mxu0 %v557
    %612 = vmatprep.subr.bf16.mxu0 0
    %613 = vmatpush1.bf16.msra.mxu0 %v556
    %614 = vmatprep.subr.bf16.mxu0 0
    %615 = vmatpush1.bf16.msra.mxu0 %v555
    %616 = vmatprep.subr.bf16.mxu0 0
    %617 = vmatpush1.bf16.msra.mxu0 %v554
    %618 = vmatprep.subr.bf16.mxu0 0
    %619 = vmatpush2.bf16.msra.mxu0 %v569
    %620 = vmatprep.subr.bf16.mxu0 0
    %621 = vmatpush2.bf16.msra.mxu0 %v568
    %622 = vmatprep.subr.bf16.mxu0 0
    %623 = vmatpush2.bf16.msra.mxu0 %v567
    %624 = vmatprep.subr.bf16.mxu0 0
    %625 = vmatpush2.bf16.msra.mxu0 %v566
    %626 = vmatprep.subr.bf16.mxu0 0
    %627 = vmatpush2.bf16.msra.mxu0 %v565
    %628 = vmatprep.subr.bf16.mxu0 0
    %629 = vmatpush2.bf16.msra.mxu0 %v564
    %630 = vmatprep.subr.bf16.mxu0 0
    %631 = vmatpush2.bf16.msra.mxu0 %v563
    %632 = vmatprep.subr.bf16.mxu0 0
    %633 = vmatpush2.bf16.msra.mxu0 %v562
    %634 = vmatprep.mubr.bf16.mxu0 %v408
    %635 = vmatmul.mubr.bf16.gmra.mxu0 %v407
    %v636 = vpop.f32.mrf.mxu0
    %v637 = vadd.f32 0.0, %v636
    %v638 = vpop.f32.mrf.mxu0
    %v639 = vpop.f32.mrf.mxu0
    %v640 = vadd.f32 0.0, %v639
    %v641 = vpop.f32.mrf.mxu0
    %642 = vdwg.mxu0
    %643 = vmatprep.subr.bf16.mxu0 0
    %644 = vmatpush1.bf16.msra.mxu0 %v577
    %645 = vmatprep.subr.bf16.mxu0 0
    %646 = vmatpush1.bf16.msra.mxu0 %v576
    %647 = vmatprep.subr.bf16.mxu0 0
    %648 = vmatpush1.bf16.msra.mxu0 %v575
    %649 = vmatprep.subr.bf16.mxu0 0
    %650 = vmatpush1.bf16.msra.mxu0 %v574
    %651 = vmatprep.subr.bf16.mxu0 0
    %652 = vmatpush1.bf16.msra.mxu0 %v573
    %653 = vmatprep.subr.bf16.mxu0 0
    %654 = vmatpush1.bf16.msra.mxu0 %v572
    %655 = vmatprep.subr.bf16.mxu0 0
    %656 = vmatpush1.bf16.msra.mxu0 %v571
    %657 = vmatprep.subr.bf16.mxu0 0
    %658 = vmatpush1.bf16.msra.mxu0 %v570
    %659 = vmatprep.subr.bf16.mxu0 0
    %660 = vmatpush2.bf16.msra.mxu0 0
    %661 = vmatprep.subr.bf16.mxu0 0
    %662 = vmatpush2.bf16.msra.mxu0 0
    %663 = vmatprep.subr.bf16.mxu0 0
    %664 = vmatpush2.bf16.msra.mxu0 0
    %665 = vmatprep.subr.bf16.mxu0 0
    %666 = vmatpush2.bf16.msra.mxu0 0
    %667 = vmatprep.subr.bf16.mxu0 0
    %668 = vmatpush2.bf16.msra.mxu0 0
    %669 = vmatprep.subr.bf16.mxu0 0
    %670 = vmatpush2.bf16.msra.mxu0 0
    %671 = vmatprep.subr.bf16.mxu0 0
    %672 = vmatpush2.bf16.msra.mxu0 0
    %673 = vmatprep.subr.bf16.mxu0 0
    %674 = vmatpush2.bf16.msra.mxu0 0
    %675 = vmatprep.mubr.bf16.mxu0 0
    %676 = vmatmul.mubr.bf16.gmra.mxu0 %v409
    %v677 = vpop.f32.mrf.mxu0
    %v678 = vadd.f32 %v637, %v677
    %v679 = vpop.f32.mrf.mxu0
    %v680 = vpop.f32.mrf.mxu0
    %v681 = vadd.f32 %v640, %v680
    %v682 = vpop.f32.mrf.mxu0
    %683 = vdwg.mxu0
    %v684 = vadd.f32 %v405, %v678
    %v685 = vadd.f32 %v406, %v681
    %686 = vst [vmem:[#allocation2] sm:$0xff] %v684
    %687 = vst [vmem:[#allocation2 + $0x8] sm:$0xff] %v685
    // Predicated region
    $region38: #{_fused_forward.1} parent=1 // pred_check
      %p688 = pneg %p53
    $region39: #{_fused_forward.1} parent=1 // pred_check_branch
      %690 = sbr.rel (%p688) target = $region41
    $region40: #{_fused_forward.1} parent=1 // pred_region
      %v691 = vld [vmem:[#allocation2] sm:$0xff]
      %v692 = vld [vmem:[#allocation2 + $0x8] sm:$0xff]
      %v693 = vld [vmem:[%s5] sm:$0x1]
      %v695 = vlaneseq
      %v696 = vshrl.u32 %v695, 7
      %v697 = vsub.s32 0, %v696
      %v698 = vrot.slane %v693, %v697
      %v700 = vadd.f32 %v691, %v698
      %v701 = vadd.f32 %v692, %v698
      %702 = vst [vmem:[#allocation8] sm:$0xff] %v700
      %703 = vst [vmem:[#allocation8 + $0x8] sm:$0xff] %v701
    $region41: #{_fused_forward.1} parent=1 // pred_fallthru
      _
    // Predicated region
    $region42: #{_fused_forward.1} parent=1 // pred_check
      _
    $region43: #{_fused_forward.1} parent=1 // pred_check_branch
      %705 = sbr.rel (0) target = $region45
    $region44: #{_fused_forward.1} parent=1 // pred_region
      %s707 = ssub.s32 256, 256
      %708 = vsyncadd [#allocation5], %s707
      %s709 = sshll.u32 [#allocation8], 4
      %s710 = int_to_ptr.vmem [resolvable:$true] %s709
      %715 = dma.vmem_to_hbm [thread:$0]  %s710, 256, %s6, [#allocation5], 128, 128, 8
    $region45: #{_fused_forward.1} parent=1 // pred_fallthru
      _
    // Predicated region
    $region46: #{_fused_forward.1} parent=1 // pred_check
      _
    $region47: #{_fused_forward.1} parent=1 // pred_check_branch
      %717 = sbr.rel (0) target = $region49
    $region48: #{_fused_forward.1} parent=1 // pred_region
      %718 = dma.done [#allocation5], 256
    $region49: #{_fused_forward.1} parent=1 // pred_fallthru
      _
    %719 = vsyncpa [#allocation4], 1
    %720 = vsyncpa [#allocation7], 1
    %721 = vsyncpa [#allocation5], 1

</llo_original>
